<compile_context>
chip_gen: v6e
topology: v6e:2x2x1
jax: 0.10.0
libtpu: 0.0.40
codegen_flags: <defaults>
</compile_context>

<pallas_src>
import jax
import jax.numpy as jnp
from jax.experimental import pallas as pl
from jax.experimental.pallas import tpu as pltpu

# ---- model hyper-params (small, consistent with the module) ----
MLP_RATIO = 4.0
DIM = 32
INTERMEDIATE = int(MLP_RATIO * DIM)    # 128 = Linear input features
BATCH = 4                              # windows * batch
SEQ = 16                               # tokens per window (4x4 window)
HIDDEN_DROPOUT_PROB = 0.0              # eval mode -> dropout is identity


def _output_dense_kernel(x_ref, w_ref, b_ref, o_ref):
    # Whole problem in one body: x_ref is the full (B*S, INTERMEDIATE) slab
    # in bf16, w_ref is (INTERMEDIATE, DIM) bf16, b_ref is (1, DIM) f32.
    y = jnp.dot(x_ref[...], w_ref[...], preferred_element_type=jnp.float32)
    y = y + b_ref[...]                  # (1, DIM) bias broadcasts over rows (VPU, f32)
    # TODO(synk): nn.Dropout is an eval-mode no-op here (no RNG path emitted).
    o_ref[...] = y.astype(o_ref.dtype)


def clap_audio_output(hidden_states, w, b):
    """hidden_states: (B, S, INTERMEDIATE) f32; w: (INTERMEDIATE, DIM); b: (1, DIM)."""
    B, S, IN = hidden_states.shape
    D = w.shape[1]

    # Layout-only flatten + bf16 cast of the matmul operands (f32 accumulation
    # inside the kernel keeps accuracy; bias stays f32).
    x2d = hidden_states.reshape(B * S, IN).astype(jnp.bfloat16)
    w_bf = w.astype(jnp.bfloat16)
    b_f32 = b.astype(jnp.float32)

    cost = pl.CostEstimate(
        flops=2 * (B * S) * IN * D,
        transcendentals=0,
        bytes_accessed=(B * S * IN + IN * D) * 2 + (B * S * D + D) * 4,
    )

    out2d = pl.pallas_call(
        _output_dense_kernel,
        out_shape=jax.ShapeDtypeStruct((B * S, D), hidden_states.dtype),
        # Grid-less call: whole operands resident in VMEM, no pipeline machinery.
        in_specs=[
            pl.BlockSpec(memory_space=pltpu.MemorySpace.VMEM),   # activations (64, 128) bf16
            pl.BlockSpec(memory_space=pltpu.MemorySpace.VMEM),   # dense weight (128, 32) bf16
            pl.BlockSpec(memory_space=pltpu.MemorySpace.VMEM),   # dense bias   (1, 32)   f32
        ],
        out_specs=pl.BlockSpec(memory_space=pltpu.MemorySpace.VMEM),
        cost_estimate=cost,
    )(x2d, w_bf, b_f32)
    return out2d.reshape(B, S, D)


def reference_f32(hidden_states, w, b):
    """Pure-JAX f32 reference mirroring the PyTorch forward (eval mode)."""
    return hidden_states @ w + b[0]


def reference_bf16(hidden_states, w, b):
    """Reference with the same bf16 operand cast / f32 accumulation as the kernel."""
    x = hidden_states.astype(jnp.bfloat16).astype(jnp.float32)
    wf = w.astype(jnp.bfloat16).astype(jnp.float32)
    return x @ wf + b[0]


if __name__ == "__main__":
    key = jax.random.PRNGKey(0)
    k_x, k_w, k_b = jax.random.split(key, 3)

    hidden_states = jax.random.normal(
        k_x, (BATCH, SEQ, INTERMEDIATE), jnp.float32)
    w = jax.random.normal(k_w, (INTERMEDIATE, DIM), jnp.float32) * 0.05
    b = jax.random.normal(k_b, (1, DIM), jnp.float32) * 0.05

    out = clap_audio_output(hidden_states, w, b)
    out = jax.block_until_ready(out)

    assert out.shape == (BATCH, SEQ, DIM)

    # Exact-path check (same bf16 operand rounding, f32 accumulation).
    ref_b = reference_bf16(hidden_states, w, b)
    assert jnp.allclose(out, ref_b, atol=1e-3, rtol=1e-3), "mismatch vs bf16-cast reference"

    # Sanity check against the pure f32 PyTorch-equivalent forward.
    ref_f = reference_f32(hidden_states, w, b)
    assert jnp.allclose(out, ref_f, atol=3e-2, rtol=3e-2), "mismatch vs f32 reference"

    print("KERNEL_OK")
</pallas_src>

<mosaic_0001>
module attributes {stable_mosaic.version = 11 : i64} {
  func.func @_output_dense_kernel(%arg0: memref<64x128xbf16, #tpu.memory_space<vmem>>, %arg1: memref<128x32xbf16, #tpu.memory_space<vmem>>, %arg2: memref<1x32xf32, #tpu.memory_space<vmem>>, %arg3: memref<64x32xf32, #tpu.memory_space<vmem>>) attributes {dimension_semantics = [], scalar_prefetch = 0 : i64, scratch_operands = 0 : i64, tpu.core_type = #tpu.core_type<tc>} {
    %c0 = arith.constant 0 : index
    %c0_0 = arith.constant 0 : index
    %0 = vector.load %arg0[%c0, %c0_0] : memref<64x128xbf16, #tpu.memory_space<vmem>>, vector<64x128xbf16>
    %c0_1 = arith.constant 0 : index
    %c0_2 = arith.constant 0 : index
    %1 = vector.load %arg1[%c0_1, %c0_2] : memref<128x32xbf16, #tpu.memory_space<vmem>>, vector<128x32xbf16>
    %cst = arith.constant dense<0.000000e+00> : vector<64x32xf32>
    %2 = tpu.matmul %0, %1, %cst {dimension_numbers = #tpu.dot_dimension_numbers<[1], [0], [0], [1], [0, 0, 1, 1], [], []>} : vector<64x128xbf16>, vector<128x32xbf16>, vector<64x32xf32> -> vector<64x32xf32>
    %c0_3 = arith.constant 0 : index
    %c0_4 = arith.constant 0 : index
    %3 = vector.load %arg2[%c0_3, %c0_4] : memref<1x32xf32, #tpu.memory_space<vmem>>, vector<1x32xf32>
    %4 = vector.broadcast %3 : vector<1x32xf32> to vector<64x32xf32>
    %5 = arith.addf %2, %4 : vector<64x32xf32>
    %c0_5 = arith.constant 0 : index
    %c0_6 = arith.constant 0 : index
    %6 = vector.load %arg3[%c0_5, %c0_6] : memref<64x32xf32, #tpu.memory_space<vmem>>, vector<64x32xf32>
    tpu.vector_store %arg3[%c0_5, %c0_6], %5 {strides = array<i32>} : memref<64x32xf32, #tpu.memory_space<vmem>>, vector<64x32xf32>,
    return
  }
}

</mosaic_0001>

<llo_original>
// kernel: tpu_custom_call.1
$region0: #{tpu_custom_call.1}
  #allocation0 [shape = 'u32[]', space=smem, size = 0x4, offset = 0x4, fixed_abs, tag = 'smem constant byte address 0x4 - core index']
  #allocation1 [shape = 'u32[144,128]{1,0:T(1,128)}', space=vmem, size = 0x12000, scoped, tag = 'internal scratch']
  %s0 = inlined_call_operand.vmem [shape: bf16[64,128], index: 0, kind: input, shape index: {}]
  %s1 = inlined_call_operand.vmem [shape: bf16[128,32], index: 1, kind: input, shape index: {}]
  %s2 = inlined_call_operand.vmem [shape: f32[1,32], index: 2, kind: input, shape index: {}]
  %s3 = inlined_call_operand.vmem [shape: f32[64,32], index: 3, kind: output, shape index: {}]
  %s4 = sld [smem:[#allocation0]]
  $region22: #{tpu_custom_call.1} parent=0
    _
  %s6 = ssub.s32 1, %s4
  %s7 = scalar_select 0, %s6, %s4
  // Predicated region
  $region2: #{tpu_custom_call.1} parent=0 // pred_check
    _
  $region3: #{tpu_custom_call.1} parent=0 // pred_check_branch
    %9 = sbr.rel (0) target = $region5
  $region4: #{tpu_custom_call.1} parent=0 // pred_region
    _
  $region5: #{tpu_custom_call.1} parent=0 // pred_fallthru
    _
  // Predicated region
  $region6: #{tpu_custom_call.1} parent=0 // pred_check
    _
  $region7: #{tpu_custom_call.1} parent=0 // pred_check_branch
    %11 = sbr.rel (0) target = $region9
  $region8: #{tpu_custom_call.1} parent=0 // pred_region
    _
  $region9: #{tpu_custom_call.1} parent=0 // pred_fallthru
    _
  // Predicated region
  $region10: #{tpu_custom_call.1} parent=0 // pred_check
    _
  $region11: #{tpu_custom_call.1} parent=0 // pred_check_branch
    %13 = sbr.rel (0) target = $region13
  $region12: #{tpu_custom_call.1} parent=0 // pred_region
    _
  $region13: #{tpu_custom_call.1} parent=0 // pred_fallthru
    _
  %v15 = vld [vmem:[%s0] sm:$0xf]
  %v16 = vld [vmem:[%s0 + $0x4] sm:$0xf]
  %v17 = vld [vmem:[%s0 + $0x8] sm:$0xf]
  %v18 = vld [vmem:[%s0 + $0xc] sm:$0xf]
  %v19 = vld [vmem:[%s0 + $0x10] sm:$0xf]
  %v20 = vld [vmem:[%s0 + $0x14] sm:$0xf]
  %v21 = vld [vmem:[%s0 + $0x18] sm:$0xf]
  %v22 = vld [vmem:[%s0 + $0x1c] sm:$0xf]
  %v23 = vld [vmem:[%s1] sm:$0xf]
  %v24 = vld [vmem:[%s1 + $0x4] sm:$0xf]
  %v25 = vld [vmem:[%s1 + $0x8] sm:$0xf]
  %v26 = vld [vmem:[%s1 + $0xc] sm:$0xf]
  %v27 = vld [vmem:[%s1 + $0x10] sm:$0xf]
  %v28 = vld [vmem:[%s1 + $0x14] sm:$0xf]
  %v29 = vld [vmem:[%s1 + $0x18] sm:$0xf]
  %v30 = vld [vmem:[%s1 + $0x1c] sm:$0xf]
  %v31 = vld [vmem:[%s1 + $0x20] sm:$0xf]
  %v32 = vld [vmem:[%s1 + $0x24] sm:$0xf]
  %v33 = vld [vmem:[%s1 + $0x28] sm:$0xf]
  %v34 = vld [vmem:[%s1 + $0x2c] sm:$0xf]
  %v35 = vld [vmem:[%s1 + $0x30] sm:$0xf]
  %v36 = vld [vmem:[%s1 + $0x34] sm:$0xf]
  %v37 = vld [vmem:[%s1 + $0x38] sm:$0xf]
  %v38 = vld [vmem:[%s1 + $0x3c] sm:$0xf]
  %v39 = vld [vmem:[%s2] sm:$0x1]
  %v41 = vlaneseq
  %v42 = vshrl.u32 %v41, 7
  %v43 = vsub.s32 0, %v42
  %v44 = vrot.slane %v39, %v43
  %v54 = vunpack.c.l.b16 %v15
  %v55 = vunpack.c.l.b16 %v16
  %v56 = vunpack.c.l.b16 %v17
  %v57 = vunpack.c.l.b16 %v18
  %v58 = vunpack.c.l.b16 %v19
  %v59 = vunpack.c.l.b16 %v20
  %v60 = vunpack.c.l.b16 %v21
  %v61 = vunpack.c.l.b16 %v22
  %v62 = vpack.c.b16 %v55, %v54
  %v63 = vpack.c.b16 %v57, %v56
  %v64 = vpack.c.b16 %v59, %v58
  %v65 = vpack.c.b16 %v61, %v60
  %v86 = vunpack.c.l.b16 %v23
  %v87 = vunpack.c.l.b16 %v24
  %v88 = vunpack.c.l.b16 %v25
  %v89 = vunpack.c.l.b16 %v26
  %v90 = vunpack.c.l.b16 %v27
  %v91 = vunpack.c.l.b16 %v28
  %v92 = vunpack.c.l.b16 %v29
  %v93 = vunpack.c.l.b16 %v30
  %v94 = vunpack.c.l.b16 %v31
  %v95 = vunpack.c.l.b16 %v32
  %v96 = vunpack.c.l.b16 %v33
  %v97 = vunpack.c.l.b16 %v34
  %v98 = vunpack.c.l.b16 %v35
  %v99 = vunpack.c.l.b16 %v36
  %v100 = vunpack.c.l.b16 %v37
  %v101 = vunpack.c.l.b16 %v38
  %v102 = vpack.c.b16 %v87, %v86
  %v103 = vpack.c.b16 %v89, %v88
  %v104 = vpack.c.b16 %v91, %v90
  %v105 = vpack.c.b16 %v93, %v92
  %v106 = vpack.c.b16 %v95, %v94
  %v107 = vpack.c.b16 %v97, %v96
  %v108 = vpack.c.b16 %v99, %v98
  %v109 = vpack.c.b16 %v101, %v100
  %118 = vmatprep.subr.bf16.mxu0 0
  %119 = vmatpush1.bf16.msra.mxu0 %v109
  %120 = vmatprep.subr.bf16.mxu0 0
  %121 = vmatpush1.bf16.msra.mxu0 %v108
  %122 = vmatprep.subr.bf16.mxu0 0
  %123 = vmatpush1.bf16.msra.mxu0 %v107
  %124 = vmatprep.subr.bf16.mxu0 0
  %125 = vmatpush1.bf16.msra.mxu0 %v106
  %126 = vmatprep.subr.bf16.mxu0 0
  %127 = vmatpush1.bf16.msra.mxu0 %v105
  %128 = vmatprep.subr.bf16.mxu0 0
  %129 = vmatpush1.bf16.msra.mxu0 %v104
  %130 = vmatprep.subr.bf16.mxu0 0
  %131 = vmatpush1.bf16.msra.mxu0 %v103
  %132 = vmatprep.subr.bf16.mxu0 0
  %133 = vmatpush1.bf16.msra.mxu0 %v102
  %134 = vmatprep.subr.bf16.mxu0 0
  %135 = vmatpush2.bf16.msra.mxu0 0
  %136 = vmatprep.subr.bf16.mxu0 0
  %137 = vmatpush2.bf16.msra.mxu0 0
  %138 = vmatprep.subr.bf16.mxu0 0
  %139 = vmatpush2.bf16.msra.mxu0 0
  %140 = vmatprep.subr.bf16.mxu0 0
  %141 = vmatpush2.bf16.msra.mxu0 0
  %142 = vmatprep.subr.bf16.mxu0 0
  %143 = vmatpush2.bf16.msra.mxu0 0
  %144 = vmatprep.subr.bf16.mxu0 0
  %145 = vmatpush2.bf16.msra.mxu0 0
  %146 = vmatprep.subr.bf16.mxu0 0
  %147 = vmatpush2.bf16.msra.mxu0 0
  %148 = vmatprep.subr.bf16.mxu0 0
  %149 = vmatpush2.bf16.msra.mxu0 0
  %150 = vmatprep.mubr.bf16.mxu0 0
  %151 = vmatmul.mubr.bf16.gmra.mxu0 %v62
  %v152 = vpop.f32.mrf.mxu0
  %v153 = vadd.f32 %v44, %v152
  %v154 = vpop.f32.mrf.mxu0
  %v155 = vpop.f32.mrf.mxu0
  %v156 = vadd.f32 %v44, %v155
  %v157 = vpop.f32.mrf.mxu0
  %158 = vmatprep.mubr.bf16.mxu0 0
  %159 = vmatmul.mubr.bf16.gmra.mxu0 %v63
  %v160 = vpop.f32.mrf.mxu0
  %v161 = vadd.f32 %v44, %v160
  %v162 = vpop.f32.mrf.mxu0
  %v163 = vpop.f32.mrf.mxu0
  %v164 = vadd.f32 %v44, %v163
  %v165 = vpop.f32.mrf.mxu0
  %166 = vmatprep.mubr.bf16.mxu0 0
  %167 = vmatmul.mubr.bf16.gmra.mxu0 %v64
  %v168 = vpop.f32.mrf.mxu0
  %v169 = vadd.f32 %v44, %v168
  %v170 = vpop.f32.mrf.mxu0
  %v171 = vpop.f32.mrf.mxu0
  %v172 = vadd.f32 %v44, %v171
  %v173 = vpop.f32.mrf.mxu0
  %174 = vmatprep.mubr.bf16.mxu0 0
  %175 = vmatmul.mubr.bf16.gmra.mxu0 %v65
  %v176 = vpop.f32.mrf.mxu0
  %v177 = vadd.f32 %v44, %v176
  %v178 = vpop.f32.mrf.mxu0
  %v179 = vpop.f32.mrf.mxu0
  %v180 = vadd.f32 %v44, %v179
  %v181 = vpop.f32.mrf.mxu0
  %182 = vdwg.mxu0
  %vm183 = vcmask 261120
  %184 = vst.msk [vmem:[%s3] sm:$0xff] %vm183, %v153
  %185 = vst.msk [vmem:[%s3 + $0x8] sm:$0xff] %vm183, %v156
  %186 = vst.msk [vmem:[%s3 + $0x10] sm:$0xff] %vm183, %v161
  %187 = vst.msk [vmem:[%s3 + $0x18] sm:$0xff] %vm183, %v164
  %188 = vst.msk [vmem:[%s3 + $0x20] sm:$0xff] %vm183, %v169
  %189 = vst.msk [vmem:[%s3 + $0x28] sm:$0xff] %vm183, %v172
  %190 = vst.msk [vmem:[%s3 + $0x30] sm:$0xff] %vm183, %v177
  %191 = vst.msk [vmem:[%s3 + $0x38] sm:$0xff] %vm183, %v180
  // Predicated region
  $region14: #{tpu_custom_call.1} parent=0 // pred_check
    _
  $region15: #{tpu_custom_call.1} parent=0 // pred_check_branch
    %193 = sbr.rel (0) target = $region17
  $region16: #{tpu_custom_call.1} parent=0 // pred_region
    _
  $region17: #{tpu_custom_call.1} parent=0 // pred_fallthru
    _
  // Predicated region
  $region18: #{tpu_custom_call.1} parent=0 // pred_check
    _
  $region19: #{tpu_custom_call.1} parent=0 // pred_check_branch
    %195 = sbr.rel (0) target = $region21
  $region20: #{tpu_custom_call.1} parent=0 // pred_region
    _
  $region21: #{tpu_custom_call.1} parent=0 // pred_fallthru
    _

</llo_original>
